<compile_context>
chip_gen: v6e
topology: v6e:2x2x1
jax: 0.10.0
libtpu: 0.0.40
codegen_flags: <defaults>
</compile_context>

<pallas_src>
import math
import functools

import jax
import jax.numpy as jnp
from jax.experimental import pallas as pl
from jax.experimental.pallas import tpu as pltpu


# ----------------------------------------------------------------------------
# Fused MLP kernel: 4x (matmul -> bias -> ReLU), activations stay on-chip.
# ----------------------------------------------------------------------------
def _fused_mlp_kernel(x_ref, w1_ref, b1_ref, w2_ref, b2_ref,
                      w3_ref, b3_ref, w4_ref, b4_ref, o_ref):
    f32 = jnp.float32
    cdt = w1_ref.dtype  # bf16 compute dtype of the matmul operands

    # x arrives as f32 straight from HBM; cast on the VPU (ample VALU slack).
    h = jnp.dot(x_ref[...].astype(cdt), w1_ref[...],
                preferred_element_type=f32)
    h = jnp.maximum(h + b1_ref[...], 0.0)

    h = jnp.dot(h.astype(cdt), w2_ref[...], preferred_element_type=f32)
    h = jnp.maximum(h + b2_ref[...], 0.0)

    h = jnp.dot(h.astype(cdt), w3_ref[...], preferred_element_type=f32)
    h = jnp.maximum(h + b3_ref[...], 0.0)

    h = jnp.dot(h.astype(cdt), w4_ref[...], preferred_element_type=f32)
    o_ref[...] = jnp.maximum(h + b4_ref[...], 0.0).astype(o_ref.dtype)


def _select_bm(B, block_m):
    """Pick the batch tile size (static, trace-time).

    - Small batches: one exact tile (no padding constraints, no overhead).
    - Large batches: cap at ceil(B/2) so the grid has >= 2 steps (both v7x
      TensorCores busy), round to a multiple of 8 for sublane alignment,
      and never exceed block_m (keeps v5e scoped-VMEM headroom).
    """
    if B <= 1024:
        return B
    bm = min(block_m, pl.cdiv(B, 2))
    bm = ((bm + 7) // 8) * 8
    return bm


def domain_adversarial_forward(x, prepared, *, block_m=2048):
    """x: (B, 128) float32 -> (B, 2) float32 (GRL is identity in forward)."""
    B, K = x.shape
    w1, b1 = prepared["w1"], prepared["b1"]
    w2, b2 = prepared["w2"], prepared["b2"]
    w3, b3 = prepared["w3"], prepared["b3"]
    w4, b4 = prepared["w4"], prepared["b4"]
    d1, d2, d3, d4 = w1.shape[1], w2.shape[1], w3.shape[1], w4.shape[1]

    bm = _select_bm(B, block_m)
    grid = (pl.cdiv(B, bm),)

    full = lambda shape: pl.BlockSpec(shape, lambda i: (0, 0))
    out = pl.pallas_call(
        _fused_mlp_kernel,
        out_shape=jax.ShapeDtypeStruct((B, d4), jnp.float32),
        grid=grid,
        in_specs=[
            pl.BlockSpec((bm, K), lambda i: (i, 0)),   # x tile (f32, ragged ok)
            full((K, d1)), full((1, d1)),              # layer 1
            full((d1, d2)), full((1, d2)),             # layer 2
            full((d2, d3)), full((1, d3)),             # layer 3
            full((d3, d4)), full((1, d4)),             # layer 4
        ],
        out_specs=pl.BlockSpec((bm, d4), lambda i: (i, 0)),
        compiler_params=pltpu.CompilerParams(
            dimension_semantics=("parallel",)),
    )(x, w1, b1, w2, b2, w3, b3, w4, b4)

    return out


# ----------------------------------------------------------------------------
# Parameters
# ----------------------------------------------------------------------------
def make_params(seed=0):
    """Deterministic params matching init_weights: xavier_normal_ W, zero b."""
    key = jax.random.PRNGKey(seed)
    k1, k2, k3, k4 = jax.random.split(key, 4)

    def xavier(k, fan_in, fan_out):
        std = math.sqrt(2.0 / (fan_in + fan_out))
        return std * jax.random.normal(k, (fan_in, fan_out), jnp.float32)

    return dict(
        w1=xavier(k1, 128, 64), b1=jnp.zeros((64,), jnp.float32),
        w2=xavier(k2, 64, 32),  b2=jnp.zeros((32,), jnp.float32),
        w3=xavier(k3, 32, 16),  b3=jnp.zeros((16,), jnp.float32),
        w4=xavier(k4, 16, 2),   b4=jnp.zeros((2,), jnp.float32),
    )


def prepare_params(params, compute_dtype=jnp.bfloat16):
    """One-time conversion done OUTSIDE the jitted forward:
    bf16 weights for the MXU, (1, N) f32 bias rows for the VPU epilogue."""
    p = {}
    for i in (1, 2, 3, 4):
        p[f"w{i}"] = jnp.asarray(params[f"w{i}"], compute_dtype)
        p[f"b{i}"] = jnp.asarray(params[f"b{i}"], jnp.float32).reshape(1, -1)
    return p


def reference_forward(x, p):
    h = jnp.maximum(x @ p["w1"] + p["b1"], 0.0)
    h = jnp.maximum(h @ p["w2"] + p["b2"], 0.0)
    h = jnp.maximum(h @ p["w3"] + p["b3"], 0.0)
    return jnp.maximum(h @ p["w4"] + p["b4"], 0.0)


if __name__ == "__main__":
    params = make_params(seed=0)
    prepared = prepare_params(params)

    fwd = jax.jit(functools.partial(domain_adversarial_forward,
                                    prepared=prepared))

    # Small-batch path (single exact tile), B=2 as in the module's usage.
    key = jax.random.PRNGKey(0)
    B = 2
    x = jax.random.normal(key, (B, 128), jnp.float32)
    out = fwd(x)
    jax.block_until_ready(out)

    expected = reference_forward(x, params)
    assert out.shape == (B, 2), out.shape
    # bf16 matmul operands with f32 accumulation over K<=128.
    assert jnp.allclose(out, expected, rtol=2e-2, atol=2e-2), (out, expected)
    assert bool(jnp.all(out >= 0.0))

    # Multi-tile path with a ragged last block (no padding, Pallas masks it).
    key2 = jax.random.PRNGKey(1)
    B2 = 2500
    x2 = jax.random.normal(key2, (B2, 128), jnp.float32)
    fwd2 = jax.jit(functools.partial(domain_adversarial_forward,
                                     prepared=prepared, block_m=1024))
    out2 = fwd2(x2)
    jax.block_until_ready(out2)
    expected2 = reference_forward(x2, params)
    assert out2.shape == (B2, 2), out2.shape
    assert jnp.allclose(out2, expected2, rtol=2e-2, atol=2e-2)
    assert bool(jnp.all(out2 >= 0.0))

    print("KERNEL_OK")
</pallas_src>

<mosaic_0001>
module attributes {stable_mosaic.version = 11 : i64} {
  func.func @_fused_mlp_kernel(%arg0: i32, %arg1: memref<2x128xf32, #tpu.memory_space<vmem>>, %arg2: memref<128x64xbf16, #tpu.memory_space<vmem>>, %arg3: memref<1x64xf32, #tpu.memory_space<vmem>>, %arg4: memref<64x32xbf16, #tpu.memory_space<vmem>>, %arg5: memref<1x32xf32, #tpu.memory_space<vmem>>, %arg6: memref<32x16xbf16, #tpu.memory_space<vmem>>, %arg7: memref<1x16xf32, #tpu.memory_space<vmem>>, %arg8: memref<16x2xbf16, #tpu.memory_space<vmem>>, %arg9: memref<1x2xf32, #tpu.memory_space<vmem>>, %arg10: memref<2x2xf32, #tpu.memory_space<vmem>>) attributes {dimension_semantics = [#tpu.dimension_semantics<parallel>], iteration_bounds = array<i64: 1>, scalar_prefetch = 0 : i64, scratch_operands = 0 : i64, tpu.core_type = #tpu.core_type<tc>, window_params = [{transform_indices = @transform_0, window_bounds = array<i64: 2, 128>}, {pipeline_mode = #tpu.pipeline_mode<synchronous>, transform_indices = @transform_1, window_bounds = array<i64: 128, 64>}, {pipeline_mode = #tpu.pipeline_mode<synchronous>, transform_indices = @transform_2, window_bounds = array<i64: 1, 64>}, {pipeline_mode = #tpu.pipeline_mode<synchronous>, transform_indices = @transform_3, window_bounds = array<i64: 64, 32>}, {pipeline_mode = #tpu.pipeline_mode<synchronous>, transform_indices = @transform_4, window_bounds = array<i64: 1, 32>}, {pipeline_mode = #tpu.pipeline_mode<synchronous>, transform_indices = @transform_5, window_bounds = array<i64: 32, 16>}, {pipeline_mode = #tpu.pipeline_mode<synchronous>, transform_indices = @transform_6, window_bounds = array<i64: 1, 16>}, {pipeline_mode = #tpu.pipeline_mode<synchronous>, transform_indices = @transform_7, window_bounds = array<i64: 16, 2>}, {pipeline_mode = #tpu.pipeline_mode<synchronous>, transform_indices = @transform_8, window_bounds = array<i64: 1, 2>}, {transform_indices = @transform_9, window_bounds = array<i64: 2, 2>}]} {
    %c0 = arith.constant 0 : index
    %c0_0 = arith.constant 0 : index
    %0 = vector.load %arg1[%c0, %c0_0] : memref<2x128xf32, #tpu.memory_space<vmem>>, vector<2x128xf32>
    %1 = arith.truncf %0 : vector<2x128xf32> to vector<2x128xbf16>
    %c0_1 = arith.constant 0 : index
    %c0_2 = arith.constant 0 : index
    %2 = vector.load %arg2[%c0_1, %c0_2] : memref<128x64xbf16, #tpu.memory_space<vmem>>, vector<128x64xbf16>
    %cst = arith.constant dense<0.000000e+00> : vector<2x64xf32>
    %3 = tpu.matmul %1, %2, %cst {dimension_numbers = #tpu.dot_dimension_numbers<[1], [0], [0], [1], [0, 0, 1, 1], [], []>} : vector<2x128xbf16>, vector<128x64xbf16>, vector<2x64xf32> -> vector<2x64xf32>
    %c0_3 = arith.constant 0 : index
    %c0_4 = arith.constant 0 : index
    %4 = vector.load %arg3[%c0_3, %c0_4] : memref<1x64xf32, #tpu.memory_space<vmem>>, vector<1x64xf32>
    %5 = vector.broadcast %4 : vector<1x64xf32> to vector<2x64xf32>
    %6 = arith.addf %3, %5 : vector<2x64xf32>
    %cst_5 = arith.constant 0.000000e+00 : f32
    %7 = vector.broadcast %cst_5 : f32 to vector<2x64xf32>
    %8 = arith.maximumf %6, %7 : vector<2x64xf32>
    %9 = arith.truncf %8 : vector<2x64xf32> to vector<2x64xbf16>
    %c0_6 = arith.constant 0 : index
    %c0_7 = arith.constant 0 : index
    %10 = vector.load %arg4[%c0_6, %c0_7] : memref<64x32xbf16, #tpu.memory_space<vmem>>, vector<64x32xbf16>
    %cst_8 = arith.constant dense<0.000000e+00> : vector<2x32xf32>
    %11 = tpu.matmul %9, %10, %cst_8 {dimension_numbers = #tpu.dot_dimension_numbers<[1], [0], [0], [1], [0, 0, 1, 1], [], []>} : vector<2x64xbf16>, vector<64x32xbf16>, vector<2x32xf32> -> vector<2x32xf32>
    %c0_9 = arith.constant 0 : index
    %c0_10 = arith.constant 0 : index
    %12 = vector.load %arg5[%c0_9, %c0_10] : memref<1x32xf32, #tpu.memory_space<vmem>>, vector<1x32xf32>
    %13 = vector.broadcast %12 : vector<1x32xf32> to vector<2x32xf32>
    %14 = arith.addf %11, %13 : vector<2x32xf32>
    %cst_11 = arith.constant 0.000000e+00 : f32
    %15 = vector.broadcast %cst_11 : f32 to vector<2x32xf32>
    %16 = arith.maximumf %14, %15 : vector<2x32xf32>
    %17 = arith.truncf %16 : vector<2x32xf32> to vector<2x32xbf16>
    %c0_12 = arith.constant 0 : index
    %c0_13 = arith.constant 0 : index
    %18 = vector.load %arg6[%c0_12, %c0_13] : memref<32x16xbf16, #tpu.memory_space<vmem>>, vector<32x16xbf16>
    %cst_14 = arith.constant dense<0.000000e+00> : vector<2x16xf32>
    %19 = tpu.matmul %17, %18, %cst_14 {dimension_numbers = #tpu.dot_dimension_numbers<[1], [0], [0], [1], [0, 0, 1, 1], [], []>} : vector<2x32xbf16>, vector<32x16xbf16>, vector<2x16xf32> -> vector<2x16xf32>
    %c0_15 = arith.constant 0 : index
    %c0_16 = arith.constant 0 : index
    %20 = vector.load %arg7[%c0_15, %c0_16] : memref<1x16xf32, #tpu.memory_space<vmem>>, vector<1x16xf32>
    %21 = vector.broadcast %20 : vector<1x16xf32> to vector<2x16xf32>
    %22 = arith.addf %19, %21 : vector<2x16xf32>
    %cst_17 = arith.constant 0.000000e+00 : f32
    %23 = vector.broadcast %cst_17 : f32 to vector<2x16xf32>
    %24 = arith.maximumf %22, %23 : vector<2x16xf32>
    %25 = arith.truncf %24 : vector<2x16xf32> to vector<2x16xbf16>
    %c0_18 = arith.constant 0 : index
    %c0_19 = arith.constant 0 : index
    %26 = vector.load %arg8[%c0_18, %c0_19] : memref<16x2xbf16, #tpu.memory_space<vmem>>, vector<16x2xbf16>
    %cst_20 = arith.constant dense<0.000000e+00> : vector<2x2xf32>
    %27 = tpu.matmul %25, %26, %cst_20 {dimension_numbers = #tpu.dot_dimension_numbers<[1], [0], [0], [1], [0, 0, 1, 1], [], []>} : vector<2x16xbf16>, vector<16x2xbf16>, vector<2x2xf32> -> vector<2x2xf32>
    %c0_21 = arith.constant 0 : index
    %c0_22 = arith.constant 0 : index
    %28 = vector.load %arg9[%c0_21, %c0_22] : memref<1x2xf32, #tpu.memory_space<vmem>>, vector<1x2xf32>
    %29 = vector.broadcast %28 : vector<1x2xf32> to vector<2x2xf32>
    %30 = arith.addf %27, %29 : vector<2x2xf32>
    %cst_23 = arith.constant 0.000000e+00 : f32
    %31 = vector.broadcast %cst_23 : f32 to vector<2x2xf32>
    %32 = arith.maximumf %30, %31 : vector<2x2xf32>
    %c0_24 = arith.constant 0 : index
    %c0_25 = arith.constant 0 : index
    %33 = vector.load %arg10[%c0_24, %c0_25] : memref<2x2xf32, #tpu.memory_space<vmem>>, vector<2x2xf32>
    tpu.vector_store %arg10[%c0_24, %c0_25], %32 {strides = array<i32>} : memref<2x2xf32, #tpu.memory_space<vmem>>, vector<2x2xf32>,
    return
  }
  func.func @transform_0(%arg0: i32) -> (i32, i32) {
    %c0_i32 = arith.constant 0 : i32
    %c0_i32_0 = arith.constant 0 : i32
    return %arg0, %c0_i32 : i32, i32
  }
  func.func @transform_1(%arg0: i32) -> (i32, i32) {
    %c0_i32 = arith.constant 0 : i32
    %c0_i32_0 = arith.constant 0 : i32
    %c0_i32_1 = arith.constant 0 : i32
    return %c0_i32, %c0_i32_0 : i32, i32
  }
  func.func @transform_2(%arg0: i32) -> (i32, i32) {
    %c0_i32 = arith.constant 0 : i32
    %c0_i32_0 = arith.constant 0 : i32
    %c0_i32_1 = arith.constant 0 : i32
    return %c0_i32, %c0_i32_0 : i32, i32
  }
  func.func @transform_3(%arg0: i32) -> (i32, i32) {
    %c0_i32 = arith.constant 0 : i32
    %c0_i32_0 = arith.constant 0 : i32
    %c0_i32_1 = arith.constant 0 : i32
    return %c0_i32, %c0_i32_0 : i32, i32
  }
  func.func @transform_4(%arg0: i32) -> (i32, i32) {
    %c0_i32 = arith.constant 0 : i32
    %c0_i32_0 = arith.constant 0 : i32
    %c0_i32_1 = arith.constant 0 : i32
    return %c0_i32, %c0_i32_0 : i32, i32
  }
  func.func @transform_5(%arg0: i32) -> (i32, i32) {
    %c0_i32 = arith.constant 0 : i32
    %c0_i32_0 = arith.constant 0 : i32
    %c0_i32_1 = arith.constant 0 : i32
    return %c0_i32, %c0_i32_0 : i32, i32
  }
  func.func @transform_6(%arg0: i32) -> (i32, i32) {
    %c0_i32 = arith.constant 0 : i32
    %c0_i32_0 = arith.constant 0 : i32
    %c0_i32_1 = arith.constant 0 : i32
    return %c0_i32, %c0_i32_0 : i32, i32
  }
  func.func @transform_7(%arg0: i32) -> (i32, i32) {
    %c0_i32 = arith.constant 0 : i32
    %c0_i32_0 = arith.constant 0 : i32
    %c0_i32_1 = arith.constant 0 : i32
    return %c0_i32, %c0_i32_0 : i32, i32
  }
  func.func @transform_8(%arg0: i32) -> (i32, i32) {
    %c0_i32 = arith.constant 0 : i32
    %c0_i32_0 = arith.constant 0 : i32
    %c0_i32_1 = arith.constant 0 : i32
    return %c0_i32, %c0_i32_0 : i32, i32
  }
  func.func @transform_9(%arg0: i32) -> (i32, i32) {
    %c0_i32 = arith.constant 0 : i32
    %c0_i32_0 = arith.constant 0 : i32
    return %arg0, %c0_i32 : i32, i32
  }
}

</mosaic_0001>

<llo_original>
// kernel: domain_adversarial_forward.1
$region0: #{domain_adversarial_forward.1}
  #allocation0 [shape = 'u32[]', space=smem, size = 0x4, offset = 0x4, fixed_abs, tag = 'smem constant byte address 0x4 - core index']
  #allocation1 [shape = 'u32[144,128]{1,0:T(1,128)}', space=vmem, size = 0x12000, scoped, tag = 'internal scratch']
  %s0 = inlined_call_operand.vmem [shape: f32[2,128], index: 0, kind: input, shape index: {}]
  %s1 = inlined_call_operand.hbm [shape: bf16[128,64], index: 1, kind: input, shape index: {}]
  %s2 = inlined_call_operand.vmem [shape: f32[1,64], index: 2, kind: input, shape index: {}]
  %s3 = inlined_call_operand.hbm [shape: bf16[64,32], index: 3, kind: input, shape index: {}]
  %s4 = inlined_call_operand.vmem [shape: f32[1,32], index: 4, kind: input, shape index: {}]
  %s5 = inlined_call_operand.hbm [shape: bf16[32,16], index: 5, kind: input, shape index: {}]
  %s6 = inlined_call_operand.vmem [shape: f32[1,16], index: 6, kind: input, shape index: {}]
  %s7 = inlined_call_operand.vmem [shape: bf16[16,2], index: 7, kind: input, shape index: {}]
  %s8 = inlined_call_operand.vmem [shape: f32[1,2], index: 8, kind: input, shape index: {}]
  %s9 = inlined_call_operand.hbm [shape: f32[2,2], index: 9, kind: output, shape index: {}]
  %s10 = sld [smem:[#allocation0]]
  $region58: #{domain_adversarial_forward.1} parent=0
    _
  %s12 = ssub.s32 1, %s10
  %s13 = scalar_select 0, %s12, %s10
  $region1: #{domain_adversarial_forward.1} parent=0
    #allocation2 [shape = 'u8[32768]{0}', space=vmem, size = 0x8000, scoped, tag = 'input window, operand 1, single buffered']
    #allocation3 [shape = 's32[1]{0}', space=sflag, size = 0x4, scoped, tag = 'scoped memory for domain_adversarial_forward.1']
    #allocation4 [shape = 's32[1]{0}', space=sflag, size = 0x4, scoped, tag = 'scoped memory for domain_adversarial_forward.1']
    #allocation5 [shape = 'u8[16384]{0}', space=vmem, size = 0x4000, scoped, tag = 'input window, operand 3, single buffered']
    #allocation6 [shape = 's32[1]{0}', space=sflag, size = 0x4, scoped, tag = 'scoped memory for domain_adversarial_forward.1']
    #allocation7 [shape = 'u8[8192]{0}', space=vmem, size = 0x2000, scoped, tag = 'input window, operand 5, single buffered']
    #allocation8 [shape = 'u8[1024]{0}', space=vmem, size = 0x400, scoped, tag = 'output window, operand 0, single buffered']
    %14 = vsyncpa [#allocation3], 0
    %15 = vsyncpa [#allocation6], 0
    %16 = vsyncpa [#allocation4], 0
    // Predicated region
    $region2: #{domain_adversarial_forward.1} parent=1 // pred_check
      _
    $region3: #{domain_adversarial_forward.1} parent=1 // pred_check_branch
      %18 = sbr.rel (0) target = $region5
    $region4: #{domain_adversarial_forward.1} parent=1 // pred_region
      _
    $region5: #{domain_adversarial_forward.1} parent=1 // pred_fallthru
      _
    // Predicated region
    $region6: #{domain_adversarial_forward.1} parent=1 // pred_check
      _
    $region7: #{domain_adversarial_forward.1} parent=1 // pred_check_branch
      %20 = sbr.rel (0) target = $region9
    $region8: #{domain_adversarial_forward.1} parent=1 // pred_region
      %s22 = ssub.s32 1024, 1024
      %23 = vsyncadd [#allocation3], %s22
      %s24 = sshll.u32 [#allocation2], 4
      %s25 = int_to_ptr.vmem [resolvable:$true] %s24
      %30 = dma.hbm_to_vmem [thread:$0]  %s1, 1024, %s25, [#allocation3], 64, 64, 4
    $region9: #{domain_adversarial_forward.1} parent=1 // pred_fallthru
      _
    // Predicated region
    $region10: #{domain_adversarial_forward.1} parent=1 // pred_check
      _
    $region11: #{domain_adversarial_forward.1} parent=1 // pred_check_branch
      %32 = sbr.rel (0) target = $region13
    $region12: #{domain_adversarial_forward.1} parent=1 // pred_region
      _
    $region13: #{domain_adversarial_forward.1} parent=1 // pred_fallthru
      _
    // Predicated region
    $region14: #{domain_adversarial_forward.1} parent=1 // pred_check
      _
    $region15: #{domain_adversarial_forward.1} parent=1 // pred_check_branch
      %34 = sbr.rel (0) target = $region17
    $region16: #{domain_adversarial_forward.1} parent=1 // pred_region
      %s36 = ssub.s32 512, 512
      %37 = vsyncadd [#allocation6], %s36
      %s38 = sshll.u32 [#allocation5], 4
      %s39 = int_to_ptr.vmem [resolvable:$true] %s38
      %44 = dma.hbm_to_vmem [thread:$0]  %s3, 512, %s39, [#allocation6], 64, 64, 4
    $region17: #{domain_adversarial_forward.1} parent=1 // pred_fallthru
      _
    // Predicated region
    $region18: #{domain_adversarial_forward.1} parent=1 // pred_check
      _
    $region19: #{domain_adversarial_forward.1} parent=1 // pred_check_branch
      %46 = sbr.rel (0) target = $region21
    $region20: #{domain_adversarial_forward.1} parent=1 // pred_region
      _
    $region21: #{domain_adversarial_forward.1} parent=1 // pred_fallthru
      _
    // Predicated region
    $region22: #{domain_adversarial_forward.1} parent=1 // pred_check
      _
    $region23: #{domain_adversarial_forward.1} parent=1 // pred_check_branch
      %48 = sbr.rel (0) target = $region25
    $region24: #{domain_adversarial_forward.1} parent=1 // pred_region
      %s50 = ssub.s32 256, 256
      %51 = vsyncadd [#allocation6], %s50
      %s52 = sshll.u32 [#allocation7], 4
      %s53 = int_to_ptr.vmem [resolvable:$true] %s52
      %58 = dma.hbm_to_vmem [thread:$0]  %s5, 256, %s53, [#allocation6], 64, 64, 4
    $region25: #{domain_adversarial_forward.1} parent=1 // pred_fallthru
      _
    // Predicated region
    $region26: #{domain_adversarial_forward.1} parent=1 // pred_check
      _
    $region27: #{domain_adversarial_forward.1} parent=1 // pred_check_branch
      %60 = sbr.rel (0) target = $region29
    $region28: #{domain_adversarial_forward.1} parent=1 // pred_region
      _
    $region29: #{domain_adversarial_forward.1} parent=1 // pred_fallthru
      _
    // Predicated region
    $region30: #{domain_adversarial_forward.1} parent=1 // pred_check
      _
    $region31: #{domain_adversarial_forward.1} parent=1 // pred_check_branch
      %62 = sbr.rel (0) target = $region33
    $region32: #{domain_adversarial_forward.1} parent=1 // pred_region
      _
    $region33: #{domain_adversarial_forward.1} parent=1 // pred_fallthru
      _
    // Predicated region
    $region34: #{domain_adversarial_forward.1} parent=1 // pred_check
      _
    $region35: #{domain_adversarial_forward.1} parent=1 // pred_check_branch
      %64 = sbr.rel (0) target = $region37
    $region36: #{domain_adversarial_forward.1} parent=1 // pred_region
      _
    $region37: #{domain_adversarial_forward.1} parent=1 // pred_fallthru
      _
    // Predicated region
    $region38: #{domain_adversarial_forward.1} parent=1 // pred_check
      _
    $region39: #{domain_adversarial_forward.1} parent=1 // pred_check_branch
      %66 = sbr.rel (0) target = $region41
    $region40: #{domain_adversarial_forward.1} parent=1 // pred_region
      %67 = dma.done [#allocation3], 1024
    $region41: #{domain_adversarial_forward.1} parent=1 // pred_fallthru
      _
    // Predicated region
    $region42: #{domain_adversarial_forward.1} parent=1 // pred_check
      _
    $region43: #{domain_adversarial_forward.1} parent=1 // pred_check_branch
      %69 = sbr.rel (0) target = $region45
    $region44: #{domain_adversarial_forward.1} parent=1 // pred_region
      %70 = dma.done [#allocation6], 512
    $region45: #{domain_adversarial_forward.1} parent=1 // pred_fallthru
      _
    // Predicated region
    $region46: #{domain_adversarial_forward.1} parent=1 // pred_check
      _
    $region47: #{domain_adversarial_forward.1} parent=1 // pred_check_branch
      %72 = sbr.rel (0) target = $region49
    $region48: #{domain_adversarial_forward.1} parent=1 // pred_region
      %73 = dma.done [#allocation6], 256
    $region49: #{domain_adversarial_forward.1} parent=1 // pred_fallthru
      _
    %v75 = vld [vmem:[%s0] sm:$0x3]
    %v76 = vpack.c.bf16 %v75, %v75
    %v77 = vld [vmem:[#allocation2] sm:$0xf]
    %v78 = vld [vmem:[#allocation2 + $0x4] sm:$0xf]
    %v79 = vld [vmem:[#allocation2 + $0x8] sm:$0xf]
    %v80 = vld [vmem:[#allocation2 + $0xc] sm:$0xf]
    %v81 = vld [vmem:[#allocation2 + $0x10] sm:$0xf]
    %v82 = vld [vmem:[#allocation2 + $0x14] sm:$0xf]
    %v83 = vld [vmem:[#allocation2 + $0x18] sm:$0xf]
    %v84 = vld [vmem:[#allocation2 + $0x1c] sm:$0xf]
    %v85 = vld [vmem:[#allocation2 + $0x20] sm:$0xf]
    %v86 = vld [vmem:[#allocation2 + $0x24] sm:$0xf]
    %v87 = vld [vmem:[#allocation2 + $0x28] sm:$0xf]
    %v88 = vld [vmem:[#allocation2 + $0x2c] sm:$0xf]
    %v89 = vld [vmem:[#allocation2 + $0x30] sm:$0xf]
    %v90 = vld [vmem:[#allocation2 + $0x34] sm:$0xf]
    %v91 = vld [vmem:[#allocation2 + $0x38] sm:$0xf]
    %v92 = vld [vmem:[#allocation2 + $0x3c] sm:$0xf]
    %v93 = vld [vmem:[%s2] sm:$0x1]
    %v95 = vlaneseq
    %v96 = vshrl.u32 %v95, 7
    %v97 = vsub.s32 0, %v96
    %v98 = vrot.slane %v93, %v97
    %v116 = vunpack.c.l.b16 %v77
    %v117 = vunpack.c.l.b16 %v78
    %v118 = vunpack.c.l.b16 %v79
    %v119 = vunpack.c.l.b16 %v80
    %v120 = vunpack.c.l.b16 %v81
    %v121 = vunpack.c.l.b16 %v82
    %v122 = vunpack.c.l.b16 %v83
    %v123 = vunpack.c.l.b16 %v84
    %v124 = vunpack.c.l.b16 %v85
    %v125 = vunpack.c.l.b16 %v86
    %v126 = vunpack.c.l.b16 %v87
    %v127 = vunpack.c.l.b16 %v88
    %v128 = vunpack.c.l.b16 %v89
    %v129 = vunpack.c.l.b16 %v90
    %v130 = vunpack.c.l.b16 %v91
    %v131 = vunpack.c.l.b16 %v92
    %v132 = vpack.c.b16 %v117, %v116
    %v133 = vpack.c.b16 %v119, %v118
    %v134 = vpack.c.b16 %v121, %v120
    %v135 = vpack.c.b16 %v123, %v122
    %v136 = vpack.c.b16 %v125, %v124
    %v137 = vpack.c.b16 %v127, %v126
    %v138 = vpack.c.b16 %v129, %v128
    %v139 = vpack.c.b16 %v131, %v130
    %148 = vmatprep.subr.bf16.mxu0 0
    %149 = vmatpush1.bf16.msra.mxu0 %v139
    %150 = vmatprep.subr.bf16.mxu0 0
    %151 = vmatpush1.bf16.msra.mxu0 %v138
    %152 = vmatprep.subr.bf16.mxu0 0
    %153 = vmatpush1.bf16.msra.mxu0 %v137
    %154 = vmatprep.subr.bf16.mxu0 0
    %155 = vmatpush1.bf16.msra.mxu0 %v136
    %156 = vmatprep.subr.bf16.mxu0 0
    %157 = vmatpush1.bf16.msra.mxu0 %v135
    %158 = vmatprep.subr.bf16.mxu0 0
    %159 = vmatpush1.bf16.msra.mxu0 %v134
    %160 = vmatprep.subr.bf16.mxu0 0
    %161 = vmatpush1.bf16.msra.mxu0 %v133
    %162 = vmatprep.subr.bf16.mxu0 0
    %163 = vmatpush1.bf16.msra.mxu0 %v132
    %164 = vmatprep.subr.bf16.mxu0 0
    %165 = vmatpush2.bf16.msra.mxu0 0
    %166 = vmatprep.subr.bf16.mxu0 0
    %167 = vmatpush2.bf16.msra.mxu0 0
    %168 = vmatprep.subr.bf16.mxu0 0
    %169 = vmatpush2.bf16.msra.mxu0 0
    %170 = vmatprep.subr.bf16.mxu0 0
    %171 = vmatpush2.bf16.msra.mxu0 0
    %172 = vmatprep.subr.bf16.mxu0 0
    %173 = vmatpush2.bf16.msra.mxu0 0
    %174 = vmatprep.subr.bf16.mxu0 0
    %175 = vmatpush2.bf16.msra.mxu0 0
    %176 = vmatprep.subr.bf16.mxu0 0
    %177 = vmatpush2.bf16.msra.mxu0 0
    %178 = vmatprep.subr.bf16.mxu0 0
    %179 = vmatpush2.bf16.msra.mxu0 0
    %180 = vmatprep.mubr.bf16.mxu0 0
    %181 = vmatmul.mubr.bf16.gmra.mxu0 %v76
    %v182 = vpop.f32.mrf.mxu0
    %v183 = vadd.f32 %v98, %v182
    %v184 = vpop.f32.mrf.mxu0
    %v185 = vpop.f32.mrf.mxu0
    %v186 = vpop.f32.mrf.mxu0
    %187 = vdwg.mxu0
    %v188 = vmax.f32 %v183, 0.0
    %v189 = vpack.c.bf16 %v188, %v188
    %v190 = vld [vmem:[#allocation5] sm:$0xf]
    %v191 = vld [vmem:[#allocation5 + $0x4] sm:$0xf]
    %v192 = vld [vmem:[#allocation5 + $0x8] sm:$0xf]
    %v193 = vld [vmem:[#allocation5 + $0xc] sm:$0xf]
    %v194 = vld [vmem:[#allocation5 + $0x10] sm:$0xf]
    %v195 = vld [vmem:[#allocation5 + $0x14] sm:$0xf]
    %v196 = vld [vmem:[#allocation5 + $0x18] sm:$0xf]
    %v197 = vld [vmem:[#allocation5 + $0x1c] sm:$0xf]
    %v198 = vld [vmem:[%s4] sm:$0x1]
    %v200 = vlaneseq
    %v201 = vshrl.u32 %v200, 7
    %v202 = vsub.s32 0, %v201
    %v203 = vrot.slane %v198, %v202
    %v213 = vunpack.c.l.b16 %v190
    %v214 = vunpack.c.l.b16 %v191
    %v215 = vunpack.c.l.b16 %v192
    %v216 = vunpack.c.l.b16 %v193
    %v217 = vunpack.c.l.b16 %v194
    %v218 = vunpack.c.l.b16 %v195
    %v219 = vunpack.c.l.b16 %v196
    %v220 = vunpack.c.l.b16 %v197
    %v221 = vpack.c.b16 %v214, %v213
    %v222 = vpack.c.b16 %v216, %v215
    %v223 = vpack.c.b16 %v218, %v217
    %v224 = vpack.c.b16 %v220, %v219
    %vm229 = vcmask 523264
    %v231 = vsel %vm229, %v189, 0
    %233 = vmatprep.subr.bf16.mxu0 0
    %234 = vmatpush1.bf16.msra.mxu0 0
    %235 = vmatprep.subr.bf16.mxu0 0
    %236 = vmatpush1.bf16.msra.mxu0 0
    %237 = vmatprep.subr.bf16.mxu0 0
    %238 = vmatpush1.bf16.msra.mxu0 0
    %239 = vmatprep.subr.bf16.mxu0 0
    %240 = vmatpush1.bf16.msra.mxu0 0
    %241 = vmatprep.subr.bf16.mxu0 0
    %242 = vmatpush1.bf16.msra.mxu0 %v224
    %243 = vmatprep.subr.bf16.mxu0 0
    %244 = vmatpush1.bf16.msra.mxu0 %v223
    %245 = vmatprep.subr.bf16.mxu0 0
    %246 = vmatpush1.bf16.msra.mxu0 %v222
    %247 = vmatprep.subr.bf16.mxu0 0
    %248 = vmatpush1.bf16.msra.mxu0 %v221
    %249 = vmatprep.subr.bf16.mxu0 0
    %250 = vmatpush2.bf16.msra.mxu0 0
    %251 = vmatprep.subr.bf16.mxu0 0
    %252 = vmatpush2.bf16.msra.mxu0 0
    %253 = vmatprep.subr.bf16.mxu0 0
    %254 = vmatpush2.bf16.msra.mxu0 0
    %255 = vmatprep.subr.bf16.mxu0 0
    %256 = vmatpush2.bf16.msra.mxu0 0
    %257 = vmatprep.subr.bf16.mxu0 0
    %258 = vmatpush2.bf16.msra.mxu0 0
    %259 = vmatprep.subr.bf16.mxu0 0
    %260 = vmatpush2.bf16.msra.mxu0 0
    %261 = vmatprep.subr.bf16.mxu0 0
    %262 = vmatpush2.bf16.msra.mxu0 0
    %263 = vmatprep.subr.bf16.mxu0 0
    %264 = vmatpush2.bf16.msra.mxu0 0
    %265 = vmatprep.mubr.bf16.mxu0 0
    %266 = vmatmul.mubr.bf16.gmra.mxu0 %v231
    %v267 = vpop.f32.mrf.mxu0
    %v268 = vadd.f32 %v203, %v267
    %v269 = vpop.f32.mrf.mxu0
    %v270 = vpop.f32.mrf.mxu0
    %v271 = vpop.f32.mrf.mxu0
    %272 = vdwg.mxu0
    %v273 = vmax.f32 %v268, 0.0
    %v274 = vpack.c.bf16 %v273, %v273
    %v275 = vld [vmem:[#allocation7] sm:$0xf]
    %v276 = vld [vmem:[#allocation7 + $0x4] sm:$0xf]
    %v277 = vld [vmem:[#allocation7 + $0x8] sm:$0xf]
    %v278 = vld [vmem:[#allocation7 + $0xc] sm:$0xf]
    %v279 = vld [vmem:[%s6] sm:$0x1]
    %v281 = vlaneseq
    %v282 = vshrl.u32 %v281, 7
    %v283 = vsub.s32 0, %v282
    %v284 = vrot.slane %v279, %v283
    %v290 = vunpack.c.l.b16 %v275
    %v291 = vunpack.c.l.b16 %v276
    %v292 = vunpack.c.l.b16 %v277
    %v293 = vunpack.c.l.b16 %v278
    %v294 = vpack.c.b16 %v291, %v290
    %v295 = vpack.c.b16 %v293, %v292
    %vm298 = vcmask 261120
    %v300 = vsel %vm298, %v274, 0
    %302 = vmatprep.subr.bf16.mxu0 0
    %303 = vmatpush1.bf16.msra.mxu0 0
    %304 = vmatprep.subr.bf16.mxu0 0
    %305 = vmatpush1.bf16.msra.mxu0 0
    %306 = vmatprep.subr.bf16.mxu0 0
    %307 = vmatpush1.bf16.msra.mxu0 0
    %308 = vmatprep.subr.bf16.mxu0 0
    %309 = vmatpush1.bf16.msra.mxu0 0
    %310 = vmatprep.subr.bf16.mxu0 0
    %311 = vmatpush1.bf16.msra.mxu0 0
    %312 = vmatprep.subr.bf16.mxu0 0
    %313 = vmatpush1.bf16.msra.mxu0 0
    %314 = vmatprep.subr.bf16.mxu0 0
    %315 = vmatpush1.bf16.msra.mxu0 %v295
    %316 = vmatprep.subr.bf16.mxu0 0
    %317 = vmatpush1.bf16.msra.mxu0 %v294
    %318 = vmatprep.subr.bf16.mxu0 0
    %319 = vmatpush2.bf16.msra.mxu0 0
    %320 = vmatprep.subr.bf16.mxu0 0
    %321 = vmatpush2.bf16.msra.mxu0 0
    %322 = vmatprep.subr.bf16.mxu0 0
    %323 = vmatpush2.bf16.msra.mxu0 0
    %324 = vmatprep.subr.bf16.mxu0 0
    %325 = vmatpush2.bf16.msra.mxu0 0
    %326 = vmatprep.subr.bf16.mxu0 0
    %327 = vmatpush2.bf16.msra.mxu0 0
    %328 = vmatprep.subr.bf16.mxu0 0
    %329 = vmatpush2.bf16.msra.mxu0 0
    %330 = vmatprep.subr.bf16.mxu0 0
    %331 = vmatpush2.bf16.msra.mxu0 0
    %332 = vmatprep.subr.bf16.mxu0 0
    %333 = vmatpush2.bf16.msra.mxu0 0
    %334 = vmatprep.mubr.bf16.mxu0 0
    %335 = vmatmul.mubr.bf16.gmra.mxu0 %v300
    %v336 = vpop.f32.mrf.mxu0
    %v337 = vadd.f32 %v284, %v336
    %v338 = vpop.f32.mrf.mxu0
    %v339 = vpop.f32.mrf.mxu0
    %v340 = vpop.f32.mrf.mxu0
    %341 = vdwg.mxu0
    %v342 = vmax.f32 %v337, 0.0
    %v343 = vpack.c.bf16 %v342, %v342
    %v344 = vld [vmem:[%s7] sm:$0xf]
    %v345 = vld [vmem:[%s7 + $0x4] sm:$0xf]
    %v346 = vld [vmem:[%s8] sm:$0x1]
    %v348 = vlaneseq
    %v349 = vshrl.u32 %v348, 7
    %v350 = vsub.s32 0, %v349
    %v351 = vrot.slane %v346, %v350
    %v355 = vunpack.c.l.b16 %v344
    %v356 = vunpack.c.l.b16 %v345
    %v357 = vpack.c.b16 %v356, %v355
    %vm359 = vcmask 130048
    %v361 = vsel %vm359, %v343, 0
    %363 = vmatprep.subr.bf16.mxu0 0
    %364 = vmatpush1.bf16.msra.mxu0 0
    %365 = vmatprep.subr.bf16.mxu0 0
    %366 = vmatpush1.bf16.msra.mxu0 0
    %367 = vmatprep.subr.bf16.mxu0 0
    %368 = vmatpush1.bf16.msra.mxu0 0
    %369 = vmatprep.subr.bf16.mxu0 0
    %370 = vmatpush1.bf16.msra.mxu0 0
    %371 = vmatprep.subr.bf16.mxu0 0
    %372 = vmatpush1.bf16.msra.mxu0 0
    %373 = vmatprep.subr.bf16.mxu0 0
    %374 = vmatpush1.bf16.msra.mxu0 0
    %375 = vmatprep.subr.bf16.mxu0 0
    %376 = vmatpush1.bf16.msra.mxu0 0
    %377 = vmatprep.subr.bf16.mxu0 0
    %378 = vmatpush1.bf16.msra.mxu0 %v357
    %379 = vmatprep.subr.bf16.mxu0 0
    %380 = vmatpush2.bf16.msra.mxu0 0
    %381 = vmatprep.subr.bf16.mxu0 0
    %382 = vmatpush2.bf16.msra.mxu0 0
    %383 = vmatprep.subr.bf16.mxu0 0
    %384 = vmatpush2.bf16.msra.mxu0 0
    %385 = vmatprep.subr.bf16.mxu0 0
    %386 = vmatpush2.bf16.msra.mxu0 0
    %387 = vmatprep.subr.bf16.mxu0 0
    %388 = vmatpush2.bf16.msra.mxu0 0
    %389 = vmatprep.subr.bf16.mxu0 0
    %390 = vmatpush2.bf16.msra.mxu0 0
    %391 = vmatprep.subr.bf16.mxu0 0
    %392 = vmatpush2.bf16.msra.mxu0 0
    %393 = vmatprep.subr.bf16.mxu0 0
    %394 = vmatpush2.bf16.msra.mxu0 0
    %395 = vmatprep.mubr.bf16.mxu0 0
    %396 = vmatmul.mubr.bf16.gmra.mxu0 %v361
    %v397 = vpop.f32.mrf.mxu0
    %v398 = vadd.f32 %v351, %v397
    %v399 = vpop.f32.mrf.mxu0
    %v400 = vpop.f32.mrf.mxu0
    %v401 = vpop.f32.mrf.mxu0
    %402 = vdwg.mxu0
    %v403 = vmax.f32 %v398, 0.0
    %vm404 = vcmask 9216
    %405 = vst.msk [vmem:[#allocation8] sm:$0x3] %vm404, %v403
    // Predicated region
    $region50: #{domain_adversarial_forward.1} parent=1 // pred_check
      _
    $region51: #{domain_adversarial_forward.1} parent=1 // pred_check_branch
      %407 = sbr.rel (0) target = $region53
    $region52: #{domain_adversarial_forward.1} parent=1 // pred_region
      %s409 = ssub.s32 32, 32
      %410 = vsyncadd [#allocation4], %s409
      %s412 = sshll.u32 [#allocation8], 4
      %s413 = int_to_ptr.vmem [resolvable:$true] %s412
      %415 = dma.vmem_to_hbm [thread:$0]  %s413, 32, %s9, [#allocation4]
    $region53: #{domain_adversarial_forward.1} parent=1 // pred_fallthru
      _
    // Predicated region
    $region54: #{domain_adversarial_forward.1} parent=1 // pred_check
      _
    $region55: #{domain_adversarial_forward.1} parent=1 // pred_check_branch
      %417 = sbr.rel (0) target = $region57
    $region56: #{domain_adversarial_forward.1} parent=1 // pred_region
      %418 = dma.done [#allocation4], 32
    $region57: #{domain_adversarial_forward.1} parent=1 // pred_fallthru
      _
    %419 = vsyncpa [#allocation3], 1
    %420 = vsyncpa [#allocation6], 1
    %421 = vsyncpa [#allocation4], 1

</llo_original>
